<compile_context>
chip_gen: v6e
topology: v6e:2x2x1
jax: 0.10.0
libtpu: 0.0.40
codegen_flags: <defaults>
</compile_context>

<pallas_src>
import functools

import jax
import jax.numpy as jnp
import numpy as np
from jax.experimental import pallas as pl
from jax.experimental.pallas import tpu as pltpu


def _forward_kernel(x_ref, xt_ref, alpha_ref, beta_ref, out_ref,
                    diff_scr, tsq_scr, *, gamma, d, block_i):
    """Grid = (n // block_i,). One step produces ALL d output rows for one tile of sample rows.

    x_ref     : (block_i, d)    i-tile of x (double-buffered, tiny)
    xt_ref    : (d, n)          fully resident (constant index_map -> one-shot DMA)
    alpha_ref : (d, n)          fully resident
    beta_ref  : (d, d, n)       fully resident (a == j term skipped statically below)
    out_ref   : (d, block_i)    lane-dense output tile
    diff_scr  : (d, block_i, n) VMEM scratch, rebuilt every step (no cross-step carry)
    tsq_scr   : (block_i, n)    VMEM scratch
    """
    inv_g2 = 1.0 / (gamma * gamma)
    two_inv_g2 = 2.0 * inv_g2
    x_blk = x_ref[...]                                        # (block_i, d), a few vregs

    # ---- prologue: diff[a, i, l] = x[i0+i, a] - x[l, a]; total_sq[i, l] = sum_a diff^2 ----
    for a in range(d):
        da = x_blk[:, a:a + 1] - xt_ref[a:a + 1, :]           # (block_i,1)-(1,n) -> (block_i,n)
        diff_scr[a] = da
        if a == 0:
            tsq_scr[...] = da * da
        else:
            tsq_scr[...] = tsq_scr[...] + da * da

    # ---- main: every variable j, reusing the resident diff/tsq scratch ----
    for j in range(d):
        diff_j = diff_scr[j]                                  # (block_i, n) static view
        sqd = tsq_scr[...] - diff_j * diff_j                  # masked distance: sum_{a != j}
        sqd = jnp.maximum(sqd, 0.0)                           # guard rounding cancellation
        K = jnp.exp(-sqd * inv_g2)                            # EUP, overlaps the VALU FMAs below

        # s[i, l] = sum_{a != j} beta[j, a, l] * diff[a, i, l]
        terms = [a for a in range(d) if a != j]
        if terms:
            s = diff_scr[terms[0]] * beta_ref[j, terms[0]:terms[0] + 1, :]
            for a in terms[1:]:
                s = s + diff_scr[a] * beta_ref[j, a:a + 1, :]
        else:  # d == 1 edge case
            s = jnp.zeros_like(K)

        # fused reduction: out[j, i] = sum_l K[i, l] * (alpha[j, l] + 2/g^2 * s[i, l])
        w = alpha_ref[j:j + 1, :] + two_inv_g2 * s            # (1, n) + (block_i, n)
        out_ref[j:j + 1, :] = (
            jnp.sum(K * w, axis=-1).reshape(1, block_i).astype(out_ref.dtype))


def _default_block_i(n):
    if n % 128 != 0:
        return n
    for cand in (256, 128):
        if n % cand == 0 and n // cand >= 2:
            return cand
    return n


def _vmem_limit_bytes(n, d, block_i):
    f32 = 4
    resident = (d * n + d * n + d * d * n) * f32              # xt + alpha + beta (one-shot)
    pipelined = 2 * (block_i * d + d * block_i) * f32         # x tile + out tile (double-buffered)
    scratch = (d * block_i * n + block_i * n) * f32           # diff + tsq (single-buffered)
    temps = 6 * block_i * n * f32                             # K, s, w, sqd, da + headroom
    need = resident + pipelined + scratch + temps
    try:
        cap = int(pltpu.get_tpu_info().vmem_capacity_bytes)
    except Exception:  # conservative fallback = v7x per-TC VMEM
        cap = 64 << 20
    return int(min(max(2 * need, 32 << 20), int(0.75 * cap)))


def admg_forward(x, alpha, beta, M, gamma=1.0, block_i=None):
    """Pallas implementation of ADMG_RKHSDagma.forward() -> (output, Sigma)."""
    n, d = x.shape
    dtype = x.dtype
    if block_i is None:
        block_i = _default_block_i(n)
    assert n % block_i == 0
    # (8,128) tiling rule for the x / output blocks.
    assert block_i == n or block_i % 128 == 0, "block_i must be n or a multiple of 128"

    xt = x.T                                                  # (d, n), tiny XLA transpose
    n_i = n // block_i

    out_t = pl.pallas_call(
        functools.partial(_forward_kernel, gamma=float(gamma), d=d, block_i=block_i),
        out_shape=jax.ShapeDtypeStruct((d, n), dtype),
        grid_spec=pltpu.PrefetchScalarGridSpec(
            num_scalar_prefetch=0,
            grid=(n_i,),
            in_specs=[
                pl.BlockSpec((block_i, d), lambda i: (i, 0)),     # x tile
                pl.BlockSpec((d, n), lambda i: (0, 0)),           # xt, fully resident
                pl.BlockSpec((d, n), lambda i: (0, 0)),           # alpha, fully resident
                pl.BlockSpec((d, d, n), lambda i: (0, 0, 0)),     # beta, fully resident
            ],
            out_specs=pl.BlockSpec((d, block_i), lambda i: (0, i)),
            scratch_shapes=[
                pltpu.VMEM((d, block_i, n), jnp.float32),         # diff tile (single-buffered)
                pltpu.VMEM((block_i, n), jnp.float32),            # total_sq tile
            ],
        ),
        compiler_params=pltpu.CompilerParams(
            dimension_semantics=("parallel",),
            vmem_limit_bytes=_vmem_limit_bytes(n, d, block_i)),
    )(x, xt, alpha, beta)
    output = out_t.T                                          # (n, d) == torch's `output`

    # ---- Sigma = SPDLogCholesky(M): d x d, plain jnp (a pallas_call here is pure overhead) ----
    L = jnp.tril(M, -1) + jnp.diag(jnp.exp(jnp.diag(M)))
    Sigma = L @ L.T
    return output, Sigma


def reference_forward(x, alpha, beta, M, gamma=1.0):
    """Pure-JAX transcription of the PyTorch forward() for verification."""
    n, d = x.shape
    omega = jnp.ones((d, d)) - jnp.eye(d)
    diff = x[:, None, :] - x[None, :, :]
    sq_dist = jnp.einsum("jk,ilk->jil", omega, diff**2)
    K = jnp.exp(-sq_dist / gamma**2)
    grad_K1 = -2.0 / gamma**2 * jnp.einsum("jil,ila->jila", K, diff)
    mask = jnp.broadcast_to(jnp.eye(d, dtype=bool)[:, None, None, :], (d, n, n, d))
    grad_K1 = jnp.where(mask, 0.0, grad_K1)
    grad_K2 = -grad_K1
    output1 = jnp.einsum("jl,jil->ij", alpha, K)
    output2 = jnp.einsum("jal,jila->ijl", beta, grad_K2).sum(axis=2)
    output = output1 + output2
    L = jnp.tril(M, -1) + jnp.diag(jnp.exp(jnp.diag(M)))
    Sigma = L @ L.T
    return output, Sigma


def _run_case(n, d, block_i=None, seed=0, gamma=1.0):
    key = jax.random.PRNGKey(seed)
    k1, k2, k3, k4 = jax.random.split(key, 4)
    x = jax.random.normal(k1, (n, d), dtype=jnp.float32)
    # Module __init__ uses zeros for alpha/beta; small random values keep the path non-trivial.
    alpha = 0.1 * jax.random.normal(k2, (d, n), dtype=jnp.float32)
    beta = 0.1 * jax.random.normal(k3, (d, d, n), dtype=jnp.float32)
    # M stands in for reverse_SPDLogCholesky(Sigma) init (deterministic synthetic).
    M = 0.1 * jax.random.normal(k4, (d, d), dtype=jnp.float32)

    out, Sigma = admg_forward(x, alpha, beta, M, gamma=gamma, block_i=block_i)
    jax.block_until_ready((out, Sigma))

    ref_out, ref_Sigma = reference_forward(x, alpha, beta, M, gamma=gamma)
    assert out.shape == (n, d) and Sigma.shape == (d, d)
    np.testing.assert_allclose(np.asarray(out), np.asarray(ref_out), rtol=1e-4, atol=1e-5)
    np.testing.assert_allclose(np.asarray(Sigma), np.asarray(ref_Sigma), rtol=1e-4, atol=1e-5)


if __name__ == "__main__":
    # Small case: whole problem in one grid step (blocks equal full dims).
    _run_case(n=16, d=4, block_i=None, seed=0)
    # Moderate case exercising the i-tiled path (two 128-row lane-dense tiles).
    _run_case(n=256, d=8, block_i=128, seed=0)
    print("KERNEL_OK")
</pallas_src>

<mosaic_0001>
module attributes {stable_mosaic.version = 11 : i64} {
  func.func @_forward_kernel(%arg0: i32, %arg1: memref<16x4xf32, #tpu.memory_space<vmem>>, %arg2: memref<4x16xf32, #tpu.memory_space<vmem>>, %arg3: memref<4x16xf32, #tpu.memory_space<vmem>>, %arg4: memref<4x4x16xf32, #tpu.memory_space<vmem>>, %arg5: memref<4x16xf32, #tpu.memory_space<vmem>>, %arg6: memref<4x16x16xf32, #tpu.memory_space<vmem>>, %arg7: memref<16x16xf32, #tpu.memory_space<vmem>>) attributes {dimension_semantics = [#tpu.dimension_semantics<parallel>], iteration_bounds = array<i64: 1>, scalar_prefetch = 0 : i64, scratch_operands = 2 : i64, tpu.core_type = #tpu.core_type<tc>, window_params = [{transform_indices = @transform_0, window_bounds = array<i64: 16, 4>}, {pipeline_mode = #tpu.pipeline_mode<synchronous>, transform_indices = @transform_1, window_bounds = array<i64: 4, 16>}, {pipeline_mode = #tpu.pipeline_mode<synchronous>, transform_indices = @transform_2, window_bounds = array<i64: 4, 16>}, {pipeline_mode = #tpu.pipeline_mode<synchronous>, transform_indices = @transform_3, window_bounds = array<i64: 4, 4, 16>}, {transform_indices = @transform_4, window_bounds = array<i64: 4, 16>}]} {
    %c0 = arith.constant 0 : index
    %c0_0 = arith.constant 0 : index
    %0 = vector.load %arg1[%c0, %c0_0] : memref<16x4xf32, #tpu.memory_space<vmem>>, vector<16x4xf32>
    %1 = vector.extract_strided_slice %0 {offsets = [0, 0], sizes = [16, 1], strides = [1, 1]} : vector<16x4xf32> to vector<16x1xf32>
    %c0_1 = arith.constant 0 : index
    %c0_2 = arith.constant 0 : index
    %2 = vector.load %arg2[%c0_1, %c0_2] : memref<4x16xf32, #tpu.memory_space<vmem>>, vector<1x16xf32>
    %3 = vector.broadcast %1 : vector<16x1xf32> to vector<16x16xf32>
    %4 = vector.broadcast %2 : vector<1x16xf32> to vector<16x16xf32>
    %5 = arith.subf %3, %4 : vector<16x16xf32>
    %c0_3 = arith.constant 0 : index
    %c0_4 = arith.constant 0 : index
    %c0_5 = arith.constant 0 : index
    %6 = vector.load %arg6[%c0_3, %c0_4, %c0_5] : memref<4x16x16xf32, #tpu.memory_space<vmem>>, vector<1x16x16xf32>
    %7 = vector.shape_cast %6 : vector<1x16x16xf32> to vector<16x16xf32>
    %8 = vector.shape_cast %5 : vector<16x16xf32> to vector<1x16x16xf32>
    tpu.vector_store %arg6[%c0_3, %c0_4, %c0_5], %8 {strides = array<i32>} : memref<4x16x16xf32, #tpu.memory_space<vmem>>, vector<1x16x16xf32>,
    %9 = arith.mulf %5, %5 : vector<16x16xf32>
    %c0_6 = arith.constant 0 : index
    %c0_7 = arith.constant 0 : index
    %10 = vector.load %arg7[%c0_6, %c0_7] : memref<16x16xf32, #tpu.memory_space<vmem>>, vector<16x16xf32>
    tpu.vector_store %arg7[%c0_6, %c0_7], %9 {strides = array<i32>} : memref<16x16xf32, #tpu.memory_space<vmem>>, vector<16x16xf32>,
    %11 = vector.extract_strided_slice %0 {offsets = [0, 1], sizes = [16, 1], strides = [1, 1]} : vector<16x4xf32> to vector<16x1xf32>
    %c1 = arith.constant 1 : index
    %c0_8 = arith.constant 0 : index
    %12 = vector.load %arg2[%c1, %c0_8] : memref<4x16xf32, #tpu.memory_space<vmem>>, vector<1x16xf32>
    %13 = vector.broadcast %11 : vector<16x1xf32> to vector<16x16xf32>
    %14 = vector.broadcast %12 : vector<1x16xf32> to vector<16x16xf32>
    %15 = arith.subf %13, %14 : vector<16x16xf32>
    %c1_9 = arith.constant 1 : index
    %c0_10 = arith.constant 0 : index
    %c0_11 = arith.constant 0 : index
    %16 = vector.load %arg6[%c1_9, %c0_10, %c0_11] : memref<4x16x16xf32, #tpu.memory_space<vmem>>, vector<1x16x16xf32>
    %17 = vector.shape_cast %16 : vector<1x16x16xf32> to vector<16x16xf32>
    %18 = vector.shape_cast %15 : vector<16x16xf32> to vector<1x16x16xf32>
    tpu.vector_store %arg6[%c1_9, %c0_10, %c0_11], %18 {strides = array<i32>} : memref<4x16x16xf32, #tpu.memory_space<vmem>>, vector<1x16x16xf32>,
    %c0_12 = arith.constant 0 : index
    %c0_13 = arith.constant 0 : index
    %19 = vector.load %arg7[%c0_12, %c0_13] : memref<16x16xf32, #tpu.memory_space<vmem>>, vector<16x16xf32>
    %20 = arith.mulf %15, %15 : vector<16x16xf32>
    %21 = arith.addf %19, %20 : vector<16x16xf32>
    %c0_14 = arith.constant 0 : index
    %c0_15 = arith.constant 0 : index
    %22 = vector.load %arg7[%c0_14, %c0_15] : memref<16x16xf32, #tpu.memory_space<vmem>>, vector<16x16xf32>
    tpu.vector_store %arg7[%c0_14, %c0_15], %21 {strides = array<i32>} : memref<16x16xf32, #tpu.memory_space<vmem>>, vector<16x16xf32>,
    %23 = vector.extract_strided_slice %0 {offsets = [0, 2], sizes = [16, 1], strides = [1, 1]} : vector<16x4xf32> to vector<16x1xf32>
    %c2 = arith.constant 2 : index
    %c0_16 = arith.constant 0 : index
    %24 = vector.load %arg2[%c2, %c0_16] : memref<4x16xf32, #tpu.memory_space<vmem>>, vector<1x16xf32>
    %25 = vector.broadcast %23 : vector<16x1xf32> to vector<16x16xf32>
    %26 = vector.broadcast %24 : vector<1x16xf32> to vector<16x16xf32>
    %27 = arith.subf %25, %26 : vector<16x16xf32>
    %c2_17 = arith.constant 2 : index
    %c0_18 = arith.constant 0 : index
    %c0_19 = arith.constant 0 : index
    %28 = vector.load %arg6[%c2_17, %c0_18, %c0_19] : memref<4x16x16xf32, #tpu.memory_space<vmem>>, vector<1x16x16xf32>
    %29 = vector.shape_cast %28 : vector<1x16x16xf32> to vector<16x16xf32>
    %30 = vector.shape_cast %27 : vector<16x16xf32> to vector<1x16x16xf32>
    tpu.vector_store %arg6[%c2_17, %c0_18, %c0_19], %30 {strides = array<i32>} : memref<4x16x16xf32, #tpu.memory_space<vmem>>, vector<1x16x16xf32>,
    %c0_20 = arith.constant 0 : index
    %c0_21 = arith.constant 0 : index
    %31 = vector.load %arg7[%c0_20, %c0_21] : memref<16x16xf32, #tpu.memory_space<vmem>>, vector<16x16xf32>
    %32 = arith.mulf %27, %27 : vector<16x16xf32>
    %33 = arith.addf %31, %32 : vector<16x16xf32>
    %c0_22 = arith.constant 0 : index
    %c0_23 = arith.constant 0 : index
    %34 = vector.load %arg7[%c0_22, %c0_23] : memref<16x16xf32, #tpu.memory_space<vmem>>, vector<16x16xf32>
    tpu.vector_store %arg7[%c0_22, %c0_23], %33 {strides = array<i32>} : memref<16x16xf32, #tpu.memory_space<vmem>>, vector<16x16xf32>,
    %35 = vector.extract_strided_slice %0 {offsets = [0, 3], sizes = [16, 1], strides = [1, 1]} : vector<16x4xf32> to vector<16x1xf32>
    %c3 = arith.constant 3 : index
    %c0_24 = arith.constant 0 : index
    %36 = vector.load %arg2[%c3, %c0_24] : memref<4x16xf32, #tpu.memory_space<vmem>>, vector<1x16xf32>
    %37 = vector.broadcast %35 : vector<16x1xf32> to vector<16x16xf32>
    %38 = vector.broadcast %36 : vector<1x16xf32> to vector<16x16xf32>
    %39 = arith.subf %37, %38 : vector<16x16xf32>
    %c3_25 = arith.constant 3 : index
    %c0_26 = arith.constant 0 : index
    %c0_27 = arith.constant 0 : index
    %40 = vector.load %arg6[%c3_25, %c0_26, %c0_27] : memref<4x16x16xf32, #tpu.memory_space<vmem>>, vector<1x16x16xf32>
    %41 = vector.shape_cast %40 : vector<1x16x16xf32> to vector<16x16xf32>
    %42 = vector.shape_cast %39 : vector<16x16xf32> to vector<1x16x16xf32>
    tpu.vector_store %arg6[%c3_25, %c0_26, %c0_27], %42 {strides = array<i32>} : memref<4x16x16xf32, #tpu.memory_space<vmem>>, vector<1x16x16xf32>,
    %c0_28 = arith.constant 0 : index
    %c0_29 = arith.constant 0 : index
    %43 = vector.load %arg7[%c0_28, %c0_29] : memref<16x16xf32, #tpu.memory_space<vmem>>, vector<16x16xf32>
    %44 = arith.mulf %39, %39 : vector<16x16xf32>
    %45 = arith.addf %43, %44 : vector<16x16xf32>
    %c0_30 = arith.constant 0 : index
    %c0_31 = arith.constant 0 : index
    %46 = vector.load %arg7[%c0_30, %c0_31] : memref<16x16xf32, #tpu.memory_space<vmem>>, vector<16x16xf32>
    tpu.vector_store %arg7[%c0_30, %c0_31], %45 {strides = array<i32>} : memref<16x16xf32, #tpu.memory_space<vmem>>, vector<16x16xf32>,
    %c0_32 = arith.constant 0 : index
    %c0_33 = arith.constant 0 : index
    %c0_34 = arith.constant 0 : index
    %47 = vector.load %arg6[%c0_32, %c0_33, %c0_34] : memref<4x16x16xf32, #tpu.memory_space<vmem>>, vector<1x16x16xf32>
    %48 = vector.shape_cast %47 : vector<1x16x16xf32> to vector<16x16xf32>
    %c0_35 = arith.constant 0 : index
    %c0_36 = arith.constant 0 : index
    %49 = vector.load %arg7[%c0_35, %c0_36] : memref<16x16xf32, #tpu.memory_space<vmem>>, vector<16x16xf32>
    %50 = arith.mulf %48, %48 : vector<16x16xf32>
    %51 = arith.subf %49, %50 : vector<16x16xf32>
    %cst = arith.constant 0.000000e+00 : f32
    %52 = vector.broadcast %cst : f32 to vector<16x16xf32>
    %53 = arith.maximumf %51, %52 : vector<16x16xf32>
    %cst_37 = arith.constant 0.000000e+00 : f32
    %54 = vector.broadcast %cst_37 : f32 to vector<16x16xf32>
    %55 = arith.subf %54, %53 : vector<16x16xf32>
    %cst_38 = arith.constant 1.000000e+00 : f32
    %56 = vector.broadcast %cst_38 : f32 to vector<16x16xf32>
    %57 = arith.mulf %55, %56 : vector<16x16xf32>
    %58 = math.exp %57 : vector<16x16xf32>
    %c1_39 = arith.constant 1 : index
    %c0_40 = arith.constant 0 : index
    %c0_41 = arith.constant 0 : index
    %59 = vector.load %arg6[%c1_39, %c0_40, %c0_41] : memref<4x16x16xf32, #tpu.memory_space<vmem>>, vector<1x16x16xf32>
    %60 = vector.shape_cast %59 : vector<1x16x16xf32> to vector<16x16xf32>
    %c0_42 = arith.constant 0 : index
    %c1_43 = arith.constant 1 : index
    %c0_44 = arith.constant 0 : index
    %61 = vector.load %arg4[%c0_42, %c1_43, %c0_44] : memref<4x4x16xf32, #tpu.memory_space<vmem>>, vector<1x1x16xf32>
    %62 = vector.shape_cast %61 : vector<1x1x16xf32> to vector<1x16xf32>
    %63 = vector.broadcast %62 : vector<1x16xf32> to vector<16x16xf32>
    %64 = arith.mulf %60, %63 : vector<16x16xf32>
    %c2_45 = arith.constant 2 : index
    %c0_46 = arith.constant 0 : index
    %c0_47 = arith.constant 0 : index
    %65 = vector.load %arg6[%c2_45, %c0_46, %c0_47] : memref<4x16x16xf32, #tpu.memory_space<vmem>>, vector<1x16x16xf32>
    %66 = vector.shape_cast %65 : vector<1x16x16xf32> to vector<16x16xf32>
    %c0_48 = arith.constant 0 : index
    %c2_49 = arith.constant 2 : index
    %c0_50 = arith.constant 0 : index
    %67 = vector.load %arg4[%c0_48, %c2_49, %c0_50] : memref<4x4x16xf32, #tpu.memory_space<vmem>>, vector<1x1x16xf32>
    %68 = vector.shape_cast %67 : vector<1x1x16xf32> to vector<1x16xf32>
    %69 = vector.broadcast %68 : vector<1x16xf32> to vector<16x16xf32>
    %70 = arith.mulf %66, %69 : vector<16x16xf32>
    %71 = arith.addf %64, %70 : vector<16x16xf32>
    %c3_51 = arith.constant 3 : index
    %c0_52 = arith.constant 0 : index
    %c0_53 = arith.constant 0 : index
    %72 = vector.load %arg6[%c3_51, %c0_52, %c0_53] : memref<4x16x16xf32, #tpu.memory_space<vmem>>, vector<1x16x16xf32>
    %73 = vector.shape_cast %72 : vector<1x16x16xf32> to vector<16x16xf32>
    %c0_54 = arith.constant 0 : index
    %c3_55 = arith.constant 3 : index
    %c0_56 = arith.constant 0 : index
    %74 = vector.load %arg4[%c0_54, %c3_55, %c0_56] : memref<4x4x16xf32, #tpu.memory_space<vmem>>, vector<1x1x16xf32>
    %75 = vector.shape_cast %74 : vector<1x1x16xf32> to vector<1x16xf32>
    %76 = vector.broadcast %75 : vector<1x16xf32> to vector<16x16xf32>
    %77 = arith.mulf %73, %76 : vector<16x16xf32>
    %78 = arith.addf %71, %77 : vector<16x16xf32>
    %c0_57 = arith.constant 0 : index
    %c0_58 = arith.constant 0 : index
    %79 = vector.load %arg3[%c0_57, %c0_58] : memref<4x16xf32, #tpu.memory_space<vmem>>, vector<1x16xf32>
    %cst_59 = arith.constant 2.000000e+00 : f32
    %80 = vector.broadcast %cst_59 : f32 to vector<16x16xf32>
    %81 = arith.mulf %80, %78 : vector<16x16xf32>
    %82 = vector.broadcast %79 : vector<1x16xf32> to vector<16x16xf32>
    %83 = arith.addf %82, %81 : vector<16x16xf32>
    %84 = arith.mulf %58, %83 : vector<16x16xf32>
    %cst_60 = arith.constant dense<0.000000e+00> : vector<16xf32>
    %85 = vector.multi_reduction <add>, %84, %cst_60 [1] : vector<16x16xf32> to vector<16xf32>
    %86 = vector.shape_cast %85 : vector<16xf32> to vector<1x16xf32>
    %c0_61 = arith.constant 0 : index
    %c0_62 = arith.constant 0 : index
    %87 = vector.load %arg5[%c0_61, %c0_62] : memref<4x16xf32, #tpu.memory_space<vmem>>, vector<1x16xf32>
    tpu.vector_store %arg5[%c0_61, %c0_62], %86 {strides = array<i32>} : memref<4x16xf32, #tpu.memory_space<vmem>>, vector<1x16xf32>,
    %c1_63 = arith.constant 1 : index
    %c0_64 = arith.constant 0 : index
    %c0_65 = arith.constant 0 : index
    %88 = vector.load %arg6[%c1_63, %c0_64, %c0_65] : memref<4x16x16xf32, #tpu.memory_space<vmem>>, vector<1x16x16xf32>
    %89 = vector.shape_cast %88 : vector<1x16x16xf32> to vector<16x16xf32>
    %c0_66 = arith.constant 0 : index
    %c0_67 = arith.constant 0 : index
    %90 = vector.load %arg7[%c0_66, %c0_67] : memref<16x16xf32, #tpu.memory_space<vmem>>, vector<16x16xf32>
    %91 = arith.mulf %89, %89 : vector<16x16xf32>
    %92 = arith.subf %90, %91 : vector<16x16xf32>
    %cst_68 = arith.constant 0.000000e+00 : f32
    %93 = vector.broadcast %cst_68 : f32 to vector<16x16xf32>
    %94 = arith.maximumf %92, %93 : vector<16x16xf32>
    %cst_69 = arith.constant 0.000000e+00 : f32
    %95 = vector.broadcast %cst_69 : f32 to vector<16x16xf32>
    %96 = arith.subf %95, %94 : vector<16x16xf32>
    %cst_70 = arith.constant 1.000000e+00 : f32
    %97 = vector.broadcast %cst_70 : f32 to vector<16x16xf32>
    %98 = arith.mulf %96, %97 : vector<16x16xf32>
    %99 = math.exp %98 : vector<16x16xf32>
    %c0_71 = arith.constant 0 : index
    %c0_72 = arith.constant 0 : index
    %c0_73 = arith.constant 0 : index
    %100 = vector.load %arg6[%c0_71, %c0_72, %c0_73] : memref<4x16x16xf32, #tpu.memory_space<vmem>>, vector<1x16x16xf32>
    %101 = vector.shape_cast %100 : vector<1x16x16xf32> to vector<16x16xf32>
    %c1_74 = arith.constant 1 : index
    %c0_75 = arith.constant 0 : index
    %c0_76 = arith.constant 0 : index
    %102 = vector.load %arg4[%c1_74, %c0_75, %c0_76] : memref<4x4x16xf32, #tpu.memory_space<vmem>>, vector<1x1x16xf32>
    %103 = vector.shape_cast %102 : vector<1x1x16xf32> to vector<1x16xf32>
    %104 = vector.broadcast %103 : vector<1x16xf32> to vector<16x16xf32>
    %105 = arith.mulf %101, %104 : vector<16x16xf32>
    %c2_77 = arith.constant 2 : index
    %c0_78 = arith.constant 0 : index
    %c0_79 = arith.constant 0 : index
    %106 = vector.load %arg6[%c2_77, %c0_78, %c0_79] : memref<4x16x16xf32, #tpu.memory_space<vmem>>, vector<1x16x16xf32>
    %107 = vector.shape_cast %106 : vector<1x16x16xf32> to vector<16x16xf32>
    %c1_80 = arith.constant 1 : index
    %c2_81 = arith.constant 2 : index
    %c0_82 = arith.constant 0 : index
    %108 = vector.load %arg4[%c1_80, %c2_81, %c0_82] : memref<4x4x16xf32, #tpu.memory_space<vmem>>, vector<1x1x16xf32>
    %109 = vector.shape_cast %108 : vector<1x1x16xf32> to vector<1x16xf32>
    %110 = vector.broadcast %109 : vector<1x16xf32> to vector<16x16xf32>
    %111 = arith.mulf %107, %110 : vector<16x16xf32>
    %112 = arith.addf %105, %111 : vector<16x16xf32>
    %c3_83 = arith.constant 3 : index
    %c0_84 = arith.constant 0 : index
    %c0_85 = arith.constant 0 : index
    %113 = vector.load %arg6[%c3_83, %c0_84, %c0_85] : memref<4x16x16xf32, #tpu.memory_space<vmem>>, vector<1x16x16xf32>
    %114 = vector.shape_cast %113 : vector<1x16x16xf32> to vector<16x16xf32>
    %c1_86 = arith.constant 1 : index
    %c3_87 = arith.constant 3 : index
    %c0_88 = arith.constant 0 : index
    %115 = vector.load %arg4[%c1_86, %c3_87, %c0_88] : memref<4x4x16xf32, #tpu.memory_space<vmem>>, vector<1x1x16xf32>
    %116 = vector.shape_cast %115 : vector<1x1x16xf32> to vector<1x16xf32>
    %117 = vector.broadcast %116 : vector<1x16xf32> to vector<16x16xf32>
    %118 = arith.mulf %114, %117 : vector<16x16xf32>
    %119 = arith.addf %112, %118 : vector<16x16xf32>
    %c1_89 = arith.constant 1 : index
    %c0_90 = arith.constant 0 : index
    %120 = vector.load %arg3[%c1_89, %c0_90] : memref<4x16xf32, #tpu.memory_space<vmem>>, vector<1x16xf32>
    %cst_91 = arith.constant 2.000000e+00 : f32
    %121 = vector.broadcast %cst_91 : f32 to vector<16x16xf32>
    %122 = arith.mulf %121, %119 : vector<16x16xf32>
    %123 = vector.broadcast %120 : vector<1x16xf32> to vector<16x16xf32>
    %124 = arith.addf %123, %122 : vector<16x16xf32>
    %125 = arith.mulf %99, %124 : vector<16x16xf32>
    %cst_92 = arith.constant dense<0.000000e+00> : vector<16xf32>
    %126 = vector.multi_reduction <add>, %125, %cst_92 [1] : vector<16x16xf32> to vector<16xf32>
    %127 = vector.shape_cast %126 : vector<16xf32> to vector<1x16xf32>
    %c1_93 = arith.constant 1 : index
    %c0_94 = arith.constant 0 : index
    %128 = vector.load %arg5[%c1_93, %c0_94] : memref<4x16xf32, #tpu.memory_space<vmem>>, vector<1x16xf32>
    tpu.vector_store %arg5[%c1_93, %c0_94], %127 {strides = array<i32>} : memref<4x16xf32, #tpu.memory_space<vmem>>, vector<1x16xf32>,
    %c2_95 = arith.constant 2 : index
    %c0_96 = arith.constant 0 : index
    %c0_97 = arith.constant 0 : index
    %129 = vector.load %arg6[%c2_95, %c0_96, %c0_97] : memref<4x16x16xf32, #tpu.memory_space<vmem>>, vector<1x16x16xf32>
    %130 = vector.shape_cast %129 : vector<1x16x16xf32> to vector<16x16xf32>
    %c0_98 = arith.constant 0 : index
    %c0_99 = arith.constant 0 : index
    %131 = vector.load %arg7[%c0_98, %c0_99] : memref<16x16xf32, #tpu.memory_space<vmem>>, vector<16x16xf32>
    %132 = arith.mulf %130, %130 : vector<16x16xf32>
    %133 = arith.subf %131, %132 : vector<16x16xf32>
    %cst_100 = arith.constant 0.000000e+00 : f32
    %134 = vector.broadcast %cst_100 : f32 to vector<16x16xf32>
    %135 = arith.maximumf %133, %134 : vector<16x16xf32>
    %cst_101 = arith.constant 0.000000e+00 : f32
    %136 = vector.broadcast %cst_101 : f32 to vector<16x16xf32>
    %137 = arith.subf %136, %135 : vector<16x16xf32>
    %cst_102 = arith.constant 1.000000e+00 : f32
    %138 = vector.broadcast %cst_102 : f32 to vector<16x16xf32>
    %139 = arith.mulf %137, %138 : vector<16x16xf32>
    %140 = math.exp %139 : vector<16x16xf32>
    %c0_103 = arith.constant 0 : index
    %c0_104 = arith.constant 0 : index
    %c0_105 = arith.constant 0 : index
    %141 = vector.load %arg6[%c0_103, %c0_104, %c0_105] : memref<4x16x16xf32, #tpu.memory_space<vmem>>, vector<1x16x16xf32>
    %142 = vector.shape_cast %141 : vector<1x16x16xf32> to vector<16x16xf32>
    %c2_106 = arith.constant 2 : index
    %c0_107 = arith.constant 0 : index
    %c0_108 = arith.constant 0 : index
    %143 = vector.load %arg4[%c2_106, %c0_107, %c0_108] : memref<4x4x16xf32, #tpu.memory_space<vmem>>, vector<1x1x16xf32>
    %144 = vector.shape_cast %143 : vector<1x1x16xf32> to vector<1x16xf32>
    %145 = vector.broadcast %144 : vector<1x16xf32> to vector<16x16xf32>
    %146 = arith.mulf %142, %145 : vector<16x16xf32>
    %c1_109 = arith.constant 1 : index
    %c0_110 = arith.constant 0 : index
    %c0_111 = arith.constant 0 : index
    %147 = vector.load %arg6[%c1_109, %c0_110, %c0_111] : memref<4x16x16xf32, #tpu.memory_space<vmem>>, vector<1x16x16xf32>
    %148 = vector.shape_cast %147 : vector<1x16x16xf32> to vector<16x16xf32>
    %c2_112 = arith.constant 2 : index
    %c1_113 = arith.constant 1 : index
    %c0_114 = arith.constant 0 : index
    %149 = vector.load %arg4[%c2_112, %c1_113, %c0_114] : memref<4x4x16xf32, #tpu.memory_space<vmem>>, vector<1x1x16xf32>
    %150 = vector.shape_cast %149 : vector<1x1x16xf32> to vector<1x16xf32>
    %151 = vector.broadcast %150 : vector<1x16xf32> to vector<16x16xf32>
    %152 = arith.mulf %148, %151 : vector<16x16xf32>
    %153 = arith.addf %146, %152 : vector<16x16xf32>
    %c3_115 = arith.constant 3 : index
    %c0_116 = arith.constant 0 : index
    %c0_117 = arith.constant 0 : index
    %154 = vector.load %arg6[%c3_115, %c0_116, %c0_117] : memref<4x16x16xf32, #tpu.memory_space<vmem>>, vector<1x16x16xf32>
    %155 = vector.shape_cast %154 : vector<1x16x16xf32> to vector<16x16xf32>
    %c2_118 = arith.constant 2 : index
    %c3_119 = arith.constant 3 : index
    %c0_120 = arith.constant 0 : index
    %156 = vector.load %arg4[%c2_118, %c3_119, %c0_120] : memref<4x4x16xf32, #tpu.memory_space<vmem>>, vector<1x1x16xf32>
    %157 = vector.shape_cast %156 : vector<1x1x16xf32> to vector<1x16xf32>
    %158 = vector.broadcast %157 : vector<1x16xf32> to vector<16x16xf32>
    %159 = arith.mulf %155, %158 : vector<16x16xf32>
    %160 = arith.addf %153, %159 : vector<16x16xf32>
    %c2_121 = arith.constant 2 : index
    %c0_122 = arith.constant 0 : index
    %161 = vector.load %arg3[%c2_121, %c0_122] : memref<4x16xf32, #tpu.memory_space<vmem>>, vector<1x16xf32>
    %cst_123 = arith.constant 2.000000e+00 : f32
    %162 = vector.broadcast %cst_123 : f32 to vector<16x16xf32>
    %163 = arith.mulf %162, %160 : vector<16x16xf32>
    %164 = vector.broadcast %161 : vector<1x16xf32> to vector<16x16xf32>
    %165 = arith.addf %164, %163 : vector<16x16xf32>
    %166 = arith.mulf %140, %165 : vector<16x16xf32>
    %cst_124 = arith.constant dense<0.000000e+00> : vector<16xf32>
    %167 = vector.multi_reduction <add>, %166, %cst_124 [1] : vector<16x16xf32> to vector<16xf32>
    %168 = vector.shape_cast %167 : vector<16xf32> to vector<1x16xf32>
    %c2_125 = arith.constant 2 : index
    %c0_126 = arith.constant 0 : index
    %169 = vector.load %arg5[%c2_125, %c0_126] : memref<4x16xf32, #tpu.memory_space<vmem>>, vector<1x16xf32>
    tpu.vector_store %arg5[%c2_125, %c0_126], %168 {strides = array<i32>} : memref<4x16xf32, #tpu.memory_space<vmem>>, vector<1x16xf32>,
    %c3_127 = arith.constant 3 : index
    %c0_128 = arith.constant 0 : index
    %c0_129 = arith.constant 0 : index
    %170 = vector.load %arg6[%c3_127, %c0_128, %c0_129] : memref<4x16x16xf32, #tpu.memory_space<vmem>>, vector<1x16x16xf32>
    %171 = vector.shape_cast %170 : vector<1x16x16xf32> to vector<16x16xf32>
    %c0_130 = arith.constant 0 : index
    %c0_131 = arith.constant 0 : index
    %172 = vector.load %arg7[%c0_130, %c0_131] : memref<16x16xf32, #tpu.memory_space<vmem>>, vector<16x16xf32>
    %173 = arith.mulf %171, %171 : vector<16x16xf32>
    %174 = arith.subf %172, %173 : vector<16x16xf32>
    %cst_132 = arith.constant 0.000000e+00 : f32
    %175 = vector.broadcast %cst_132 : f32 to vector<16x16xf32>
    %176 = arith.maximumf %174, %175 : vector<16x16xf32>
    %cst_133 = arith.constant 0.000000e+00 : f32
    %177 = vector.broadcast %cst_133 : f32 to vector<16x16xf32>
    %178 = arith.subf %177, %176 : vector<16x16xf32>
    %cst_134 = arith.constant 1.000000e+00 : f32
    %179 = vector.broadcast %cst_134 : f32 to vector<16x16xf32>
    %180 = arith.mulf %178, %179 : vector<16x16xf32>
    %181 = math.exp %180 : vector<16x16xf32>
    %c0_135 = arith.constant 0 : index
    %c0_136 = arith.constant 0 : index
    %c0_137 = arith.constant 0 : index
    %182 = vector.load %arg6[%c0_135, %c0_136, %c0_137] : memref<4x16x16xf32, #tpu.memory_space<vmem>>, vector<1x16x16xf32>
    %183 = vector.shape_cast %182 : vector<1x16x16xf32> to vector<16x16xf32>
    %c3_138 = arith.constant 3 : index
    %c0_139 = arith.constant 0 : index
    %c0_140 = arith.constant 0 : index
    %184 = vector.load %arg4[%c3_138, %c0_139, %c0_140] : memref<4x4x16xf32, #tpu.memory_space<vmem>>, vector<1x1x16xf32>
    %185 = vector.shape_cast %184 : vector<1x1x16xf32> to vector<1x16xf32>
    %186 = vector.broadcast %185 : vector<1x16xf32> to vector<16x16xf32>
    %187 = arith.mulf %183, %186 : vector<16x16xf32>
    %c1_141 = arith.constant 1 : index
    %c0_142 = arith.constant 0 : index
    %c0_143 = arith.constant 0 : index
    %188 = vector.load %arg6[%c1_141, %c0_142, %c0_143] : memref<4x16x16xf32, #tpu.memory_space<vmem>>, vector<1x16x16xf32>
    %189 = vector.shape_cast %188 : vector<1x16x16xf32> to vector<16x16xf32>
    %c3_144 = arith.constant 3 : index
    %c1_145 = arith.constant 1 : index
    %c0_146 = arith.constant 0 : index
    %190 = vector.load %arg4[%c3_144, %c1_145, %c0_146] : memref<4x4x16xf32, #tpu.memory_space<vmem>>, vector<1x1x16xf32>
    %191 = vector.shape_cast %190 : vector<1x1x16xf32> to vector<1x16xf32>
    %192 = vector.broadcast %191 : vector<1x16xf32> to vector<16x16xf32>
    %193 = arith.mulf %189, %192 : vector<16x16xf32>
    %194 = arith.addf %187, %193 : vector<16x16xf32>
    %c2_147 = arith.constant 2 : index
    %c0_148 = arith.constant 0 : index
    %c0_149 = arith.constant 0 : index
    %195 = vector.load %arg6[%c2_147, %c0_148, %c0_149] : memref<4x16x16xf32, #tpu.memory_space<vmem>>, vector<1x16x16xf32>
    %196 = vector.shape_cast %195 : vector<1x16x16xf32> to vector<16x16xf32>
    %c3_150 = arith.constant 3 : index
    %c2_151 = arith.constant 2 : index
    %c0_152 = arith.constant 0 : index
    %197 = vector.load %arg4[%c3_150, %c2_151, %c0_152] : memref<4x4x16xf32, #tpu.memory_space<vmem>>, vector<1x1x16xf32>
    %198 = vector.shape_cast %197 : vector<1x1x16xf32> to vector<1x16xf32>
    %199 = vector.broadcast %198 : vector<1x16xf32> to vector<16x16xf32>
    %200 = arith.mulf %196, %199 : vector<16x16xf32>
    %201 = arith.addf %194, %200 : vector<16x16xf32>
    %c3_153 = arith.constant 3 : index
    %c0_154 = arith.constant 0 : index
    %202 = vector.load %arg3[%c3_153, %c0_154] : memref<4x16xf32, #tpu.memory_space<vmem>>, vector<1x16xf32>
    %cst_155 = arith.constant 2.000000e+00 : f32
    %203 = vector.broadcast %cst_155 : f32 to vector<16x16xf32>
    %204 = arith.mulf %203, %201 : vector<16x16xf32>
    %205 = vector.broadcast %202 : vector<1x16xf32> to vector<16x16xf32>
    %206 = arith.addf %205, %204 : vector<16x16xf32>
    %207 = arith.mulf %181, %206 : vector<16x16xf32>
    %cst_156 = arith.constant dense<0.000000e+00> : vector<16xf32>
    %208 = vector.multi_reduction <add>, %207, %cst_156 [1] : vector<16x16xf32> to vector<16xf32>
    %209 = vector.shape_cast %208 : vector<16xf32> to vector<1x16xf32>
    %c3_157 = arith.constant 3 : index
    %c0_158 = arith.constant 0 : index
    %210 = vector.load %arg5[%c3_157, %c0_158] : memref<4x16xf32, #tpu.memory_space<vmem>>, vector<1x16xf32>
    tpu.vector_store %arg5[%c3_157, %c0_158], %209 {strides = array<i32>} : memref<4x16xf32, #tpu.memory_space<vmem>>, vector<1x16xf32>,
    return
  }
  func.func @transform_0(%arg0: i32) -> (i32, i32) {
    %c0_i32 = arith.constant 0 : i32
    %c0_i32_0 = arith.constant 0 : i32
    return %arg0, %c0_i32 : i32, i32
  }
  func.func @transform_1(%arg0: i32) -> (i32, i32) {
    %c0_i32 = arith.constant 0 : i32
    %c0_i32_0 = arith.constant 0 : i32
    %c0_i32_1 = arith.constant 0 : i32
    return %c0_i32, %c0_i32_0 : i32, i32
  }
  func.func @transform_2(%arg0: i32) -> (i32, i32) {
    %c0_i32 = arith.constant 0 : i32
    %c0_i32_0 = arith.constant 0 : i32
    %c0_i32_1 = arith.constant 0 : i32
    return %c0_i32, %c0_i32_0 : i32, i32
  }
  func.func @transform_3(%arg0: i32) -> (i32, i32, i32) {
    %c0_i32 = arith.constant 0 : i32
    %c0_i32_0 = arith.constant 0 : i32
    %c0_i32_1 = arith.constant 0 : i32
    %c0_i32_2 = arith.constant 0 : i32
    return %c0_i32, %c0_i32_0, %c0_i32_1 : i32, i32, i32
  }
  func.func @transform_4(%arg0: i32) -> (i32, i32) {
    %c0_i32 = arith.constant 0 : i32
    %c0_i32_0 = arith.constant 0 : i32
    return %c0_i32, %arg0 : i32, i32
  }
}

</mosaic_0001>

<llo_original>
// kernel: tpu_custom_call.1
$region0: #{tpu_custom_call.1}
  #allocation0 [shape = 'u32[]', space=smem, size = 0x4, offset = 0x4, fixed_abs, tag = 'smem constant byte address 0x4 - core index']
  #allocation1 [shape = 'u32[144,128]{1,0:T(1,128)}', space=vmem, size = 0x12000, scoped, tag = 'internal scratch']
  #allocation2 [shape = 'f32[4,16,16]{2,1,0:T(8,128)}', space=vmem, size = 0x8000, scoped, tag = 'scratch operand']
  #allocation3 [shape = 'f32[16,16]{1,0:T(8,128)}', space=vmem, size = 0x2000, scoped, tag = 'scratch operand']
  %s0 = inlined_call_operand.vmem [shape: f32[16,4], index: 0, kind: input, shape index: {}]
  %s1 = inlined_call_operand.vmem [shape: f32[4,16], index: 1, kind: input, shape index: {}]
  %s2 = inlined_call_operand.vmem [shape: f32[4,16], index: 2, kind: input, shape index: {}]
  %s3 = inlined_call_operand.vmem [shape: f32[4,4,16], index: 3, kind: input, shape index: {}]
  %s4 = inlined_call_operand.hbm [shape: f32[4,16], index: 4, kind: output, shape index: {}]
  %s5 = sld [smem:[#allocation0]]
  $region26: #{tpu_custom_call.1} parent=0
    _
  %s7 = ssub.s32 1, %s5
  %s8 = scalar_select 0, %s7, %s5
  $region1: #{tpu_custom_call.1} parent=0
    #allocation4 [shape = 'u8[2048]{0}', space=vmem, size = 0x800, scoped, tag = 'output window, operand 0, single buffered']
    #allocation5 [shape = 's32[1]{0}', space=sflag, size = 0x4, scoped, tag = 'scoped memory for tpu_custom_call.1']
    %9 = vsyncpa [#allocation5], 0
    // Predicated region
    $region2: #{tpu_custom_call.1} parent=1 // pred_check
      _
    $region3: #{tpu_custom_call.1} parent=1 // pred_check_branch
      %11 = sbr.rel (0) target = $region5
    $region4: #{tpu_custom_call.1} parent=1 // pred_region
      _
    $region5: #{tpu_custom_call.1} parent=1 // pred_fallthru
      _
    // Predicated region
    $region6: #{tpu_custom_call.1} parent=1 // pred_check
      _
    $region7: #{tpu_custom_call.1} parent=1 // pred_check_branch
      %13 = sbr.rel (0) target = $region9
    $region8: #{tpu_custom_call.1} parent=1 // pred_region
      _
    $region9: #{tpu_custom_call.1} parent=1 // pred_fallthru
      _
    // Predicated region
    $region10: #{tpu_custom_call.1} parent=1 // pred_check
      _
    $region11: #{tpu_custom_call.1} parent=1 // pred_check_branch
      %15 = sbr.rel (0) target = $region13
    $region12: #{tpu_custom_call.1} parent=1 // pred_region
      _
    $region13: #{tpu_custom_call.1} parent=1 // pred_fallthru
      _
    // Predicated region
    $region14: #{tpu_custom_call.1} parent=1 // pred_check
      _
    $region15: #{tpu_custom_call.1} parent=1 // pred_check_branch
      %17 = sbr.rel (0) target = $region17
    $region16: #{tpu_custom_call.1} parent=1 // pred_region
      _
    $region17: #{tpu_custom_call.1} parent=1 // pred_fallthru
      _
    %v18 = vld [vmem:[%s0] sm:$0xff]
    %v19 = vld [vmem:[%s0 + $0x8] sm:$0xff]
    %v20 = vld [vmem:[%s1] sm:$0x1]
    %22 = vset.pattern.permute.xlu0 0
    %23 = vperm.xlu0 %22, %v18
    %v24 = vpop.permute.xlu0 %23
    %27 = vset.pattern.permute.xlu0 0
    %28 = vperm.xlu0 %27, %v19
    %v29 = vpop.permute.xlu0 %28
    %v31 = vlaneseq
    %v32 = vshrl.u32 %v31, 7
    %v33 = vsub.s32 0, %v32
    %v34 = vrot.slane %v20, %v33
    %v35 = vsub.f32 %v24, %v34
    %v36 = vsub.f32 %v29, %v34
    %vm37 = vcmask 130048
    %38 = vst.msk [vmem:[#allocation2] sm:$0xff] %vm37, %v35
    %39 = vst.msk [vmem:[#allocation2 + $0x8] sm:$0xff] %vm37, %v36
    %v40 = vmul.f32 %v35, %v35
    %v41 = vmul.f32 %v36, %v36
    %42 = vst.msk [vmem:[#allocation3] sm:$0xff] %vm37, %v40
    %43 = vst.msk [vmem:[#allocation3 + $0x8] sm:$0xff] %vm37, %v41
    %v44 = vld [vmem:[%s1 + $0x1] sm:$0x1]
    %45 = vset.pattern.permute.xlu0 1
    %46 = vperm.xlu0 %45, %v18
    %v47 = vpop.permute.xlu0 %46
    %49 = vset.pattern.permute.xlu0 1
    %50 = vperm.xlu0 %49, %v19
    %v51 = vpop.permute.xlu0 %50
    %v53 = vlaneseq
    %v54 = vshrl.u32 %v53, 7
    %v55 = vsub.s32 0, %v54
    %v56 = vrot.slane %v44, %v55
    %v57 = vsub.f32 %v47, %v56
    %v58 = vsub.f32 %v51, %v56
    %s59 = scalar_lea.vmem [#allocation2], 16
    %60 = vst.msk [vmem:[%s59] sm:$0xff] %vm37, %v57
    %61 = vst.msk [vmem:[%s59 + $0x8] sm:$0xff] %vm37, %v58
    %v62 = vld [vmem:[#allocation3] sm:$0xff]
    %v63 = vld [vmem:[#allocation3 + $0x8] sm:$0xff]
    %v64 = vmul.f32 %v57, %v57
    %v65 = vmul.f32 %v58, %v58
    %v66 = vadd.f32 %v62, %v64
    %v67 = vadd.f32 %v63, %v65
    %68 = vst.msk [vmem:[#allocation3] sm:$0xff] %vm37, %v66
    %69 = vst.msk [vmem:[#allocation3 + $0x8] sm:$0xff] %vm37, %v67
    %v70 = vld [vmem:[%s1 + $0x2] sm:$0x1]
    %71 = vset.pattern.permute.xlu0 2
    %72 = vperm.xlu0 %71, %v18
    %v73 = vpop.permute.xlu0 %72
    %75 = vset.pattern.permute.xlu0 2
    %76 = vperm.xlu0 %75, %v19
    %v77 = vpop.permute.xlu0 %76
    %v79 = vlaneseq
    %v80 = vshrl.u32 %v79, 7
    %v81 = vsub.s32 0, %v80
    %v82 = vrot.slane %v70, %v81
    %v83 = vsub.f32 %v73, %v82
    %v84 = vsub.f32 %v77, %v82
    %s85 = scalar_lea.vmem [#allocation2], 32
    %86 = vst.msk [vmem:[%s85] sm:$0xff] %vm37, %v83
    %87 = vst.msk [vmem:[%s85 + $0x8] sm:$0xff] %vm37, %v84
    %v88 = vld [vmem:[#allocation3] sm:$0xff]
    %v89 = vld [vmem:[#allocation3 + $0x8] sm:$0xff]
    %v90 = vmul.f32 %v83, %v83
    %v91 = vmul.f32 %v84, %v84
    %v92 = vadd.f32 %v88, %v90
    %v93 = vadd.f32 %v89, %v91
    %94 = vst.msk [vmem:[#allocation3] sm:$0xff] %vm37, %v92
    %95 = vst.msk [vmem:[#allocation3 + $0x8] sm:$0xff] %vm37, %v93
    %v96 = vld [vmem:[%s1 + $0x3] sm:$0x1]
    %97 = vset.pattern.permute.xlu0 3
    %98 = vperm.xlu0 %97, %v18
    %v99 = vpop.permute.xlu0 %98
    %101 = vset.pattern.permute.xlu0 3
    %102 = vperm.xlu0 %101, %v19
    %v103 = vpop.permute.xlu0 %102
    %v105 = vlaneseq
    %v106 = vshrl.u32 %v105, 7
    %v107 = vsub.s32 0, %v106
    %v108 = vrot.slane %v96, %v107
    %v109 = vsub.f32 %v99, %v108
    %v110 = vsub.f32 %v103, %v108
    %s111 = scalar_lea.vmem [#allocation2], 48
    %112 = vst.msk [vmem:[%s111] sm:$0xff] %vm37, %v109
    %113 = vst.msk [vmem:[%s111 + $0x8] sm:$0xff] %vm37, %v110
    %v114 = vld [vmem:[#allocation3] sm:$0xff]
    %v115 = vld [vmem:[#allocation3 + $0x8] sm:$0xff]
    %v116 = vmul.f32 %v109, %v109
    %v117 = vmul.f32 %v110, %v110
    %v118 = vadd.f32 %v114, %v116
    %v119 = vadd.f32 %v115, %v117
    %120 = vst.msk [vmem:[#allocation3] sm:$0xff] %vm37, %v118
    %121 = vst.msk [vmem:[#allocation3 + $0x8] sm:$0xff] %vm37, %v119
    %v122 = vld [vmem:[#allocation2] sm:$0xff]
    %v123 = vld [vmem:[#allocation2 + $0x8] sm:$0xff]
    %v124 = vld [vmem:[#allocation3] sm:$0xff]
    %v125 = vld [vmem:[#allocation3 + $0x8] sm:$0xff]
    %v126 = vmul.f32 %v122, %v122
    %v127 = vmul.f32 %v123, %v123
    %v128 = vsub.f32 %v124, %v126
    %v129 = vsub.f32 %v125, %v127
    %v130 = vmax.f32 %v128, 0.0
    %v131 = vmax.f32 %v129, 0.0
    %v132 = vsub.f32 0.0, %v130
    %v133 = vsub.f32 0.0, %v131
    %v134 = vmul.f32 %v132, 1.442695
    %v135 = vpow.pop %v134
    %v136 = vmul.f32 %v133, 1.442695
    %v137 = vpow.pop %v136
    %v138 = vld [vmem:[%s59] sm:$0xff]
    %v139 = vld [vmem:[%s59 + $0x8] sm:$0xff]
    %v140 = vld [vmem:[%s3 + $0x1] sm:$0x1]
    %v141 = vlaneseq
    %v142 = vshrl.u32 %v141, 7
    %v143 = vsub.s32 0, %v142
    %v144 = vrot.slane %v140, %v143
    %v145 = vmul.f32 %v138, %v144
    %v146 = vmul.f32 %v139, %v144
    %v147 = vld [vmem:[%s85] sm:$0xff]
    %v148 = vld [vmem:[%s85 + $0x8] sm:$0xff]
    %v149 = vld [vmem:[%s3 + $0x2] sm:$0x1]
    %v150 = vlaneseq
    %v151 = vshrl.u32 %v150, 7
    %v152 = vsub.s32 0, %v151
    %v153 = vrot.slane %v149, %v152
    %v154 = vmul.f32 %v147, %v153
    %v155 = vmul.f32 %v148, %v153
    %v156 = vadd.f32 %v145, %v154
    %v157 = vadd.f32 %v146, %v155
    %v158 = vld [vmem:[%s111] sm:$0xff]
    %v159 = vld [vmem:[%s111 + $0x8] sm:$0xff]
    %v160 = vld [vmem:[%s3 + $0x3] sm:$0x1]
    %v161 = vlaneseq
    %v162 = vshrl.u32 %v161, 7
    %v163 = vsub.s32 0, %v162
    %v164 = vrot.slane %v160, %v163
    %v165 = vmul.f32 %v158, %v164
    %v166 = vmul.f32 %v159, %v164
    %v167 = vadd.f32 %v156, %v165
    %v168 = vadd.f32 %v157, %v166
    %v169 = vld [vmem:[%s2] sm:$0x1]
    %v170 = vmul.f32 %v167, 2.0
    %v171 = vmul.f32 %v168, 2.0
    %v172 = vlaneseq
    %v173 = vshrl.u32 %v172, 7
    %v174 = vsub.s32 0, %v173
    %v175 = vrot.slane %v169, %v174
    %v176 = vadd.f32 %v175, %v170
    %v177 = vadd.f32 %v175, %v171
    %v178 = vmul.f32 %v135, %v176
    %v179 = vmul.f32 %v137, %v177
    %v180 = vsel %vm37, %v178, 0.0
    %181 = vadd.xlane.f32.xlu0 %v180
    %v182 = vpop.xlane.xlu0 %181
    %v183 = vsel %vm37, %v179, 0.0
    %184 = vadd.xlane.f32.xlu0 %v183
    %v185 = vpop.xlane.xlu0 %184
    %v188 = vlaneseq
    %v189 = vand.u32 %v188, 127
    %v190 = vlaneseq
    %v191 = vshrl.u32 %v190, 7
    %v192 = vsub.s32 %v189, %v191
    %v193 = vrot.slane %v182, %v192
    %v194 = vadd.s32 %v189, 4294967288
    %v195 = vlaneseq
    %v196 = vshrl.u32 %v195, 7
    %v197 = vsub.s32 %v194, %v196
    %v198 = vrot.slane %v185, %v197
    %vm199 = vcmask 130112
    %v200 = vsel %vm199, %v198, %v193
    %vm202 = vcmask 122880
    %203 = vst.msk [vmem:[#allocation4] sm:$0x1] %vm202, %v200
    %v204 = vld [vmem:[%s59] sm:$0xff]
    %v205 = vld [vmem:[%s59 + $0x8] sm:$0xff]
    %v206 = vld [vmem:[#allocation3] sm:$0xff]
    %v207 = vld [vmem:[#allocation3 + $0x8] sm:$0xff]
    %v208 = vmul.f32 %v204, %v204
    %v209 = vmul.f32 %v205, %v205
    %v210 = vsub.f32 %v206, %v208
    %v211 = vsub.f32 %v207, %v209
    %v212 = vmax.f32 %v210, 0.0
    %v213 = vmax.f32 %v211, 0.0
    %v214 = vsub.f32 0.0, %v212
    %v215 = vsub.f32 0.0, %v213
    %v216 = vmul.f32 %v214, 1.442695
    %v217 = vpow.pop %v216
    %v218 = vmul.f32 %v215, 1.442695
    %v219 = vpow.pop %v218
    %v220 = vld [vmem:[#allocation2] sm:$0xff]
    %v221 = vld [vmem:[#allocation2 + $0x8] sm:$0xff]
    %s222 = scalar_lea.vmem %s3, 4
    %v223 = vld [vmem:[%s222] sm:$0x1]
    %v224 = vlaneseq
    %v225 = vshrl.u32 %v224, 7
    %v226 = vsub.s32 0, %v225
    %v227 = vrot.slane %v223, %v226
    %v228 = vmul.f32 %v220, %v227
    %v229 = vmul.f32 %v221, %v227
    %v230 = vld [vmem:[%s85] sm:$0xff]
    %v231 = vld [vmem:[%s85 + $0x8] sm:$0xff]
    %v232 = vld [vmem:[%s222 + $0x2] sm:$0x1]
    %v233 = vlaneseq
    %v234 = vshrl.u32 %v233, 7
    %v235 = vsub.s32 0, %v234
    %v236 = vrot.slane %v232, %v235
    %v237 = vmul.f32 %v230, %v236
    %v238 = vmul.f32 %v231, %v236
    %v239 = vadd.f32 %v228, %v237
    %v240 = vadd.f32 %v229, %v238
    %v241 = vld [vmem:[%s111] sm:$0xff]
    %v242 = vld [vmem:[%s111 + $0x8] sm:$0xff]
    %v243 = vld [vmem:[%s222 + $0x3] sm:$0x1]
    %v244 = vlaneseq
    %v245 = vshrl.u32 %v244, 7
    %v246 = vsub.s32 0, %v245
    %v247 = vrot.slane %v243, %v246
    %v248 = vmul.f32 %v241, %v247
    %v249 = vmul.f32 %v242, %v247
    %v250 = vadd.f32 %v239, %v248
    %v251 = vadd.f32 %v240, %v249
    %v252 = vld [vmem:[%s2 + $0x1] sm:$0x1]
    %v253 = vmul.f32 %v250, 2.0
    %v254 = vmul.f32 %v251, 2.0
    %v255 = vlaneseq
    %v256 = vshrl.u32 %v255, 7
    %v257 = vsub.s32 0, %v256
    %v258 = vrot.slane %v252, %v257
    %v259 = vadd.f32 %v258, %v253
    %v260 = vadd.f32 %v258, %v254
    %v261 = vmul.f32 %v217, %v259
    %v262 = vmul.f32 %v219, %v260
    %v263 = vsel %vm37, %v261, 0.0
    %264 = vadd.xlane.f32.xlu0 %v263
    %v265 = vpop.xlane.xlu0 %264
    %v266 = vsel %vm37, %v262, 0.0
    %267 = vadd.xlane.f32.xlu0 %v266
    %v268 = vpop.xlane.xlu0 %267
    %v271 = vlaneseq
    %v272 = vshrl.u32 %v271, 7
    %v273 = vsub.s32 %v189, %v272
    %v274 = vrot.slane %v265, %v273
    %v275 = vlaneseq
    %v276 = vshrl.u32 %v275, 7
    %v277 = vsub.s32 %v194, %v276
    %v278 = vrot.slane %v268, %v277
    %v279 = vsel %vm199, %v278, %v274
    %281 = vst.msk [vmem:[#allocation4 + $0x1] sm:$0x1] %vm202, %v279
    %v282 = vld [vmem:[%s85] sm:$0xff]
    %v283 = vld [vmem:[%s85 + $0x8] sm:$0xff]
    %v284 = vld [vmem:[#allocation3] sm:$0xff]
    %v285 = vld [vmem:[#allocation3 + $0x8] sm:$0xff]
    %v286 = vmul.f32 %v282, %v282
    %v287 = vmul.f32 %v283, %v283
    %v288 = vsub.f32 %v284, %v286
    %v289 = vsub.f32 %v285, %v287
    %v290 = vmax.f32 %v288, 0.0
    %v291 = vmax.f32 %v289, 0.0
    %v292 = vsub.f32 0.0, %v290
    %v293 = vsub.f32 0.0, %v291
    %v294 = vmul.f32 %v292, 1.442695
    %v295 = vpow.pop %v294
    %v296 = vmul.f32 %v293, 1.442695
    %v297 = vpow.pop %v296
    %v298 = vld [vmem:[#allocation2] sm:$0xff]
    %v299 = vld [vmem:[#allocation2 + $0x8] sm:$0xff]
    %s300 = scalar_lea.vmem %s3, 8
    %v301 = vld [vmem:[%s300] sm:$0x1]
    %v302 = vlaneseq
    %v303 = vshrl.u32 %v302, 7
    %v304 = vsub.s32 0, %v303
    %v305 = vrot.slane %v301, %v304
    %v306 = vmul.f32 %v298, %v305
    %v307 = vmul.f32 %v299, %v305
    %v308 = vld [vmem:[%s59] sm:$0xff]
    %v309 = vld [vmem:[%s59 + $0x8] sm:$0xff]
    %v310 = vld [vmem:[%s300 + $0x1] sm:$0x1]
    %v311 = vlaneseq
    %v312 = vshrl.u32 %v311, 7
    %v313 = vsub.s32 0, %v312
    %v314 = vrot.slane %v310, %v313
    %v315 = vmul.f32 %v308, %v314
    %v316 = vmul.f32 %v309, %v314
    %v317 = vadd.f32 %v306, %v315
    %v318 = vadd.f32 %v307, %v316
    %v319 = vld [vmem:[%s111] sm:$0xff]
    %v320 = vld [vmem:[%s111 + $0x8] sm:$0xff]
    %v321 = vld [vmem:[%s300 + $0x3] sm:$0x1]
    %v322 = vlaneseq
    %v323 = vshrl.u32 %v322, 7
    %v324 = vsub.s32 0, %v323
    %v325 = vrot.slane %v321, %v324
    %v326 = vmul.f32 %v319, %v325
    %v327 = vmul.f32 %v320, %v325
    %v328 = vadd.f32 %v317, %v326
    %v329 = vadd.f32 %v318, %v327
    %v330 = vld [vmem:[%s2 + $0x2] sm:$0x1]
    %v331 = vmul.f32 %v328, 2.0
    %v332 = vmul.f32 %v329, 2.0
    %v333 = vlaneseq
    %v334 = vshrl.u32 %v333, 7
    %v335 = vsub.s32 0, %v334
    %v336 = vrot.slane %v330, %v335
    %v337 = vadd.f32 %v336, %v331
    %v338 = vadd.f32 %v336, %v332
    %v339 = vmul.f32 %v295, %v337
    %v340 = vmul.f32 %v297, %v338
    %v341 = vsel %vm37, %v339, 0.0
    %342 = vadd.xlane.f32.xlu0 %v341
    %v343 = vpop.xlane.xlu0 %342
    %v344 = vsel %vm37, %v340, 0.0
    %345 = vadd.xlane.f32.xlu0 %v344
    %v346 = vpop.xlane.xlu0 %345
    %v349 = vlaneseq
    %v350 = vshrl.u32 %v349, 7
    %v351 = vsub.s32 %v189, %v350
    %v352 = vrot.slane %v343, %v351
    %v353 = vlaneseq
    %v354 = vshrl.u32 %v353, 7
    %v355 = vsub.s32 %v194, %v354
    %v356 = vrot.slane %v346, %v355
    %v357 = vsel %vm199, %v356, %v352
    %359 = vst.msk [vmem:[#allocation4 + $0x2] sm:$0x1] %vm202, %v357
    %v360 = vld [vmem:[%s111] sm:$0xff]
    %v361 = vld [vmem:[%s111 + $0x8] sm:$0xff]
    %v362 = vld [vmem:[#allocation3] sm:$0xff]
    %v363 = vld [vmem:[#allocation3 + $0x8] sm:$0xff]
    %v364 = vmul.f32 %v360, %v360
    %v365 = vmul.f32 %v361, %v361
    %v366 = vsub.f32 %v362, %v364
    %v367 = vsub.f32 %v363, %v365
    %v368 = vmax.f32 %v366, 0.0
    %v369 = vmax.f32 %v367, 0.0
    %v370 = vsub.f32 0.0, %v368
    %v371 = vsub.f32 0.0, %v369
    %v372 = vmul.f32 %v370, 1.442695
    %v373 = vpow.pop %v372
    %v374 = vmul.f32 %v371, 1.442695
    %v375 = vpow.pop %v374
    %v376 = vld [vmem:[#allocation2] sm:$0xff]
    %v377 = vld [vmem:[#allocation2 + $0x8] sm:$0xff]
    %s378 = scalar_lea.vmem %s3, 12
    %v379 = vld [vmem:[%s378] sm:$0x1]
    %v380 = vlaneseq
    %v381 = vshrl.u32 %v380, 7
    %v382 = vsub.s32 0, %v381
    %v383 = vrot.slane %v379, %v382
    %v384 = vmul.f32 %v376, %v383
    %v385 = vmul.f32 %v377, %v383
    %v386 = vld [vmem:[%s59] sm:$0xff]
    %v387 = vld [vmem:[%s59 + $0x8] sm:$0xff]
    %v388 = vld [vmem:[%s378 + $0x1] sm:$0x1]
    %v389 = vlaneseq
    %v390 = vshrl.u32 %v389, 7
    %v391 = vsub.s32 0, %v390
    %v392 = vrot.slane %v388, %v391
    %v393 = vmul.f32 %v386, %v392
    %v394 = vmul.f32 %v387, %v392
    %v395 = vadd.f32 %v384, %v393
    %v396 = vadd.f32 %v385, %v394
    %v397 = vld [vmem:[%s85] sm:$0xff]
    %v398 = vld [vmem:[%s85 + $0x8] sm:$0xff]
    %v399 = vld [vmem:[%s378 + $0x2] sm:$0x1]
    %v400 = vlaneseq
    %v401 = vshrl.u32 %v400, 7
    %v402 = vsub.s32 0, %v401
    %v403 = vrot.slane %v399, %v402
    %v404 = vmul.f32 %v397, %v403
    %v405 = vmul.f32 %v398, %v403
    %v406 = vadd.f32 %v395, %v404
    %v407 = vadd.f32 %v396, %v405
    %v408 = vld [vmem:[%s2 + $0x3] sm:$0x1]
    %v409 = vmul.f32 %v406, 2.0
    %v410 = vmul.f32 %v407, 2.0
    %v411 = vlaneseq
    %v412 = vshrl.u32 %v411, 7
    %v413 = vsub.s32 0, %v412
    %v414 = vrot.slane %v408, %v413
    %v415 = vadd.f32 %v414, %v409
    %v416 = vadd.f32 %v414, %v410
    %v417 = vmul.f32 %v373, %v415
    %v418 = vmul.f32 %v375, %v416
    %v419 = vsel %vm37, %v417, 0.0
    %420 = vadd.xlane.f32.xlu0 %v419
    %v421 = vpop.xlane.xlu0 %420
    %v422 = vsel %vm37, %v418, 0.0
    %423 = vadd.xlane.f32.xlu0 %v422
    %v424 = vpop.xlane.xlu0 %423
    %v427 = vlaneseq
    %v428 = vshrl.u32 %v427, 7
    %v429 = vsub.s32 %v189, %v428
    %v430 = vrot.slane %v421, %v429
    %v431 = vlaneseq
    %v432 = vshrl.u32 %v431, 7
    %v433 = vsub.s32 %v194, %v432
    %v434 = vrot.slane %v424, %v433
    %v435 = vsel %vm199, %v434, %v430
    %437 = vst.msk [vmem:[#allocation4 + $0x3] sm:$0x1] %vm202, %v435
    // Predicated region
    $region18: #{tpu_custom_call.1} parent=1 // pred_check
      _
    $region19: #{tpu_custom_call.1} parent=1 // pred_check_branch
      %439 = sbr.rel (0) target = $region21
    $region20: #{tpu_custom_call.1} parent=1 // pred_region
      %s441 = ssub.s32 64, 64
      %442 = vsyncadd [#allocation5], %s441
      %s444 = sshll.u32 [#allocation4], 4
      %s445 = int_to_ptr.vmem [resolvable:$true] %s444
      %447 = dma.vmem_to_hbm [thread:$0]  %s445, 64, %s4, [#allocation5]
    $region21: #{tpu_custom_call.1} parent=1 // pred_fallthru
      _
    // Predicated region
    $region22: #{tpu_custom_call.1} parent=1 // pred_check
      _
    $region23: #{tpu_custom_call.1} parent=1 // pred_check_branch
      %449 = sbr.rel (0) target = $region25
    $region24: #{tpu_custom_call.1} parent=1 // pred_region
      %450 = dma.done [#allocation5], 64
    $region25: #{tpu_custom_call.1} parent=1 // pred_fallthru
      _
    %451 = vsyncpa [#allocation5], 1

</llo_original>
